<compile_context>
chip_gen: v7x
topology: tpu7x:2x2x1
jax: 0.10.0
libtpu: 0.0.40
codegen_flags: <defaults>
</compile_context>

<pallas_src>
import functools

import jax
import jax.numpy as jnp
from jax.experimental import pallas as pl
from jax.experimental.pallas import tpu as pltpu


def _round_up(x, m):
    return ((x + m - 1) // m) * m


def combnet_kernel(d1_ref, d2_ref, w1_ref, w2_ref, fw1_ref, fw2_ref,
                   bias_ref, fb2_ref, out_ref, *, act_dtype):
    """One batch tile: d1/d2 [TB, in_pad] -> out [TB, out_pad] (f32, lane-dense)."""
    biases = bias_ref[...]                      # [3, hid_pad] f32 (BN pre-folded)
    b1 = biases[0:1, :]
    b2 = biases[1:2, :]
    fb1 = biases[2:3, :]

    def trunk(d):
        # Linear1(+BN1) -> ReLU -> (Dropout = id in eval) -> Linear2(+BN2)
        h = jnp.dot(d, w1_ref[...], preferred_element_type=jnp.float32) + b1
        h = jnp.maximum(h, 0.0).astype(act_dtype)        # bf16 carry (no-op for f32)
        return jnp.dot(h, w2_ref[...], preferred_element_type=jnp.float32) + b2

    h1 = trunk(d1_ref[...])                     # [TB, hid_pad] f32
    h2 = trunk(d2_ref[...])                     # [TB, hid_pad] f32

    # prod_fc combination (product in f32, cast once for the fc matmul)
    comb = (h1 * h2).astype(act_dtype)

    # fc head: Linear3(+BN3) -> ReLU -> (Dropout = id) -> Linear4
    g = jnp.dot(comb, fw1_ref[...], preferred_element_type=jnp.float32) + fb1
    g = jnp.maximum(g, 0.0).astype(act_dtype)
    out_ref[...] = (jnp.dot(g, fw2_ref[...], preferred_element_type=jnp.float32)
                    + fb2_ref[...])             # lane-dense [TB, out_pad] f32


def fold_bn(gamma, beta, running_mean, running_var, eps=1e-5):
    """Fold eval-mode BatchNorm1d into per-feature scale/shift."""
    scale = gamma / jnp.sqrt(running_var + eps)
    shift = beta - running_mean * scale
    return scale, shift


def combnet_rw_forward(data, params, input_dim, *, block_b=256,
                       matmul_dtype=jnp.bfloat16, align=128,
                       vmem_limit_bytes=48 << 20):
    """data: [B, 2*input_dim] f32 -> [B, output_dim] f32 (prod_fc, eval mode).

    align: lane multiple for feature padding (128; use 256 on v6e/v7x for full
    MXU tiles).  block_b: batch tile (multiple of 16); re-derive per generation
    against VMEM (v7x has 64 MiB) so each TensorCore sees several grid tiles.
    """
    B, twice_in = data.shape
    assert twice_in == 2 * input_dim
    (w1, b1, bn1, w2, b2, bn2, fw1, fb1, bn3, fw2, fb2) = params
    hidden_dim = w1.shape[1]
    output_dim = fw2.shape[1]

    # --- fold BN into the preceding Linear: W' = W * s,  b' = b * s + t ------
    s1, t1 = fold_bn(*bn1)
    s2, t2 = fold_bn(*bn2)
    fs1, ft1 = fold_bn(*bn3)
    w1f = w1 * s1[None, :]
    w2f = w2 * s2[None, :]
    fw1f = fw1 * fs1[None, :]
    b1f = b1 * s1 + t1
    b2f = b2 * s2 + t2
    fb1f = fb1 * fs1 + ft1

    # --- zero-pad feature dims to lane multiples (exact through the network) -
    in_pad = _round_up(input_dim, align)
    hid_pad = _round_up(hidden_dim, align)
    out_pad = _round_up(output_dim, align)

    def pad2(a, r, c):
        return jnp.pad(a, ((0, r - a.shape[0]), (0, c - a.shape[1])))

    def pad1(v, n):
        return jnp.pad(v, (0, n - v.shape[0]))

    w1p = pad2(w1f, in_pad, hid_pad).astype(matmul_dtype)
    w2p = pad2(w2f, hid_pad, hid_pad).astype(matmul_dtype)
    fw1p = pad2(fw1f, hid_pad, hid_pad).astype(matmul_dtype)
    fw2p = pad2(fw2, hid_pad, out_pad).astype(matmul_dtype)
    bias_pack = jnp.stack([pad1(b1f, hid_pad), pad1(b2f, hid_pad),
                           pad1(fb1f, hid_pad)], axis=0)          # [3, hid_pad] f32
    fb2p = pad1(fb2, out_pad)[None, :]                            # [1, out_pad] f32

    # --- batch tiling: multiple of 16 (bf16 sublane packing) -----------------
    tb = min(block_b, _round_up(B, 16))
    b_pad = _round_up(B, tb)
    grid = (b_pad // tb,)

    # Split / row-pad / lane-pad / cast the streaming input once (per half this
    # fuses into one HBM pass); the kernel then streams lane-aligned bf16 tiles.
    def pack_half(d):
        d = jnp.pad(d, ((0, b_pad - B), (0, in_pad - input_dim)))
        return d.astype(matmul_dtype)

    d1p = pack_half(data[:, :input_dim])
    d2p = pack_half(data[:, input_dim:])

    # --- BlockSpecs -----------------------------------------------------------
    def const_spec(shape):
        # Constant index map -> single-buffer (double buffering only doubles
        # resident weight VMEM for zero benefit).
        return pl.BlockSpec(shape, lambda i: (0, 0), pipeline_mode=pl.Buffered(1))

    data_spec = pl.BlockSpec((tb, in_pad), lambda i: (i, 0))
    in_specs = [
        data_spec, data_spec,                                     # d1, d2 tiles
        const_spec(w1p.shape), const_spec(w2p.shape),             # trunk weights
        const_spec(fw1p.shape), const_spec(fw2p.shape),           # fc weights
        const_spec(bias_pack.shape), const_spec(fb2p.shape),      # biases
    ]
    out_specs = pl.BlockSpec((tb, out_pad), lambda i: (i, 0))

    # --- advisory cost estimate -----------------------------------------------
    flops = b_pad * (4 * in_pad * hid_pad + 6 * hid_pad * hid_pad
                     + 2 * hid_pad * out_pad)
    weight_bytes = sum(int(a.size) * a.dtype.itemsize
                       for a in (w1p, w2p, fw1p, fw2p, bias_pack, fb2p))
    data_bytes = (int(d1p.size) + int(d2p.size)) * d1p.dtype.itemsize
    out_bytes = b_pad * out_pad * 4
    cost = pl.CostEstimate(flops=int(flops), transcendentals=0,
                           bytes_accessed=int(data_bytes + weight_bytes + out_bytes))

    kernel = functools.partial(combnet_kernel, act_dtype=matmul_dtype)
    out = pl.pallas_call(
        kernel,
        grid=grid,
        in_specs=in_specs,
        out_specs=out_specs,
        out_shape=jax.ShapeDtypeStruct((b_pad, out_pad), jnp.float32),
        compiler_params=pltpu.CompilerParams(
            dimension_semantics=("parallel",),     # v7x: shard tiles over both TCs
            vmem_limit_bytes=vmem_limit_bytes),
        cost_estimate=cost,
    )(d1p, d2p, w1p, w2p, fw1p, fw2p, bias_pack, fb2p)

    # Padded batch rows / lanes hold garbage/zeros; slice before any reduction.
    return out[:B, :output_dim]


def init_params(key, input_dim, hidden_dim, output_dim):
    """Deterministic parameter init (shapes mirror the nn.Module)."""
    ks = jax.random.split(key, 16)

    def linear(kw, kb, fan_in, fan_out):
        bound = 1.0 / jnp.sqrt(fan_in)
        w = jax.random.uniform(kw, (fan_in, fan_out), jnp.float32, -bound, bound)
        b = jax.random.uniform(kb, (fan_out,), jnp.float32, -bound, bound)
        return w, b

    def bn(kg, kb, dim):
        gamma = 1.0 + 0.1 * jax.random.normal(kg, (dim,), jnp.float32)
        beta = 0.1 * jax.random.normal(kb, (dim,), jnp.float32)
        running_mean = jnp.zeros((dim,), jnp.float32)
        running_var = jnp.ones((dim,), jnp.float32)
        return (gamma, beta, running_mean, running_var)

    w1, b1 = linear(ks[0], ks[1], input_dim, hidden_dim)
    bn1 = bn(ks[2], ks[3], hidden_dim)
    w2, b2 = linear(ks[4], ks[5], hidden_dim, hidden_dim)
    bn2 = bn(ks[6], ks[7], hidden_dim)
    fw1, fb1 = linear(ks[8], ks[9], hidden_dim, hidden_dim)
    bn3 = bn(ks[10], ks[11], hidden_dim)
    fw2, fb2 = linear(ks[12], ks[13], hidden_dim, output_dim)
    return (w1, b1, bn1, w2, b2, bn2, fw1, fb1, bn3, fw2, fb2)


def reference_forward(data, params, input_dim):
    """Plain-JAX f32 reference of the same eval-mode forward (prod_fc)."""
    (w1, b1, bn1, w2, b2, bn2, fw1, fb1, bn3, fw2, fb2) = params
    s1, t1 = fold_bn(*bn1)
    s2, t2 = fold_bn(*bn2)
    fs1, ft1 = fold_bn(*bn3)

    def tr(x):
        h = x @ w1 + b1
        h = h * s1 + t1
        h = jnp.maximum(h, 0.0)
        h = h @ w2 + b2
        return h * s2 + t2

    d1, d2 = data[:, :input_dim], data[:, input_dim:]
    comb = tr(d1) * tr(d2)
    h = comb @ fw1 + fb1
    h = h * fs1 + ft1
    h = jnp.maximum(h, 0.0)
    return h @ fw2 + fb2


if __name__ == "__main__":
    input_dim, hidden_dim, output_dim = 16, 32, 4
    batch = 8

    key = jax.random.PRNGKey(0)
    k_data, k_params = jax.random.split(key)
    data = jax.random.normal(k_data, (batch, 2 * input_dim), jnp.float32)
    params = init_params(k_params, input_dim, hidden_dim, output_dim)

    ref = reference_forward(data, params, input_dim)

    # Exactness check: f32 matmul path matches the plain-JAX reference tightly.
    out_f32 = jax.block_until_ready(
        combnet_rw_forward(data, params, input_dim, matmul_dtype=jnp.float32))
    assert out_f32.shape == (batch, output_dim)
    assert jnp.allclose(out_f32, ref, atol=1e-5, rtol=1e-5), "f32 mismatch vs reference"

    # Performance path: bf16 streaming data / weights / activation carry,
    # f32 MXU accumulation (looser tolerance).
    out_bf16 = jax.block_until_ready(
        combnet_rw_forward(data, params, input_dim, matmul_dtype=jnp.bfloat16))
    assert out_bf16.shape == (batch, output_dim)
    assert jnp.allclose(out_bf16, ref, atol=5e-2, rtol=5e-2), "bf16 mismatch vs reference"

    print("KERNEL_OK")
</pallas_src>

<mosaic_0001>
module attributes {stable_mosaic.version = 11 : i64} {
  func.func @combnet_kernel(%arg0: i32, %arg1: memref<16x128xf32, #tpu.memory_space<vmem>>, %arg2: memref<16x128xf32, #tpu.memory_space<vmem>>, %arg3: memref<128x128xf32, #tpu.memory_space<vmem>>, %arg4: memref<128x128xf32, #tpu.memory_space<vmem>>, %arg5: memref<128x128xf32, #tpu.memory_space<vmem>>, %arg6: memref<128x128xf32, #tpu.memory_space<vmem>>, %arg7: memref<3x128xf32, #tpu.memory_space<vmem>>, %arg8: memref<1x128xf32, #tpu.memory_space<vmem>>, %arg9: memref<16x128xf32, #tpu.memory_space<vmem>>) attributes {dimension_semantics = [#tpu.dimension_semantics<parallel>], iteration_bounds = array<i64: 1>, scalar_prefetch = 0 : i64, scratch_operands = 0 : i64, tpu.core_type = #tpu.core_type<tc>, window_params = [{transform_indices = @transform_0, window_bounds = array<i64: 16, 128>}, {transform_indices = @transform_1, window_bounds = array<i64: 16, 128>}, {pipeline_mode = #tpu.pipeline_mode<synchronous>, transform_indices = @transform_2, window_bounds = array<i64: 128, 128>}, {pipeline_mode = #tpu.pipeline_mode<synchronous>, transform_indices = @transform_3, window_bounds = array<i64: 128, 128>}, {pipeline_mode = #tpu.pipeline_mode<synchronous>, transform_indices = @transform_4, window_bounds = array<i64: 128, 128>}, {pipeline_mode = #tpu.pipeline_mode<synchronous>, transform_indices = @transform_5, window_bounds = array<i64: 128, 128>}, {pipeline_mode = #tpu.pipeline_mode<synchronous>, transform_indices = @transform_6, window_bounds = array<i64: 3, 128>}, {pipeline_mode = #tpu.pipeline_mode<synchronous>, transform_indices = @transform_7, window_bounds = array<i64: 1, 128>}, {transform_indices = @transform_8, window_bounds = array<i64: 16, 128>}]} {
    %c0 = arith.constant 0 : index
    %c0_0 = arith.constant 0 : index
    %0 = vector.load %arg7[%c0, %c0_0] : memref<3x128xf32, #tpu.memory_space<vmem>>, vector<3x128xf32>
    %1 = vector.extract_strided_slice %0 {offsets = [0, 0], sizes = [1, 128], strides = [1, 1]} : vector<3x128xf32> to vector<1x128xf32>
    %2 = vector.extract_strided_slice %0 {offsets = [1, 0], sizes = [1, 128], strides = [1, 1]} : vector<3x128xf32> to vector<1x128xf32>
    %3 = vector.extract_strided_slice %0 {offsets = [2, 0], sizes = [1, 128], strides = [1, 1]} : vector<3x128xf32> to vector<1x128xf32>
    %c0_1 = arith.constant 0 : index
    %c0_2 = arith.constant 0 : index
    %4 = vector.load %arg1[%c0_1, %c0_2] : memref<16x128xf32, #tpu.memory_space<vmem>>, vector<16x128xf32>
    %c0_3 = arith.constant 0 : index
    %c0_4 = arith.constant 0 : index
    %5 = vector.load %arg3[%c0_3, %c0_4] : memref<128x128xf32, #tpu.memory_space<vmem>>, vector<128x128xf32>
    %cst = arith.constant dense<0.000000e+00> : vector<16x128xf32>
    %6 = tpu.matmul %4, %5, %cst {dimension_numbers = #tpu.dot_dimension_numbers<[1], [0], [0], [1], [0, 0, 1, 1], [], []>} : vector<16x128xf32>, vector<128x128xf32>, vector<16x128xf32> -> vector<16x128xf32>
    %7 = vector.broadcast %1 : vector<1x128xf32> to vector<16x128xf32>
    %8 = arith.addf %6, %7 : vector<16x128xf32>
    %cst_5 = arith.constant 0.000000e+00 : f32
    %9 = vector.broadcast %cst_5 : f32 to vector<16x128xf32>
    %10 = arith.maximumf %8, %9 : vector<16x128xf32>
    %c0_6 = arith.constant 0 : index
    %c0_7 = arith.constant 0 : index
    %11 = vector.load %arg4[%c0_6, %c0_7] : memref<128x128xf32, #tpu.memory_space<vmem>>, vector<128x128xf32>
    %cst_8 = arith.constant dense<0.000000e+00> : vector<16x128xf32>
    %12 = tpu.matmul %10, %11, %cst_8 {dimension_numbers = #tpu.dot_dimension_numbers<[1], [0], [0], [1], [0, 0, 1, 1], [], []>} : vector<16x128xf32>, vector<128x128xf32>, vector<16x128xf32> -> vector<16x128xf32>
    %13 = vector.broadcast %2 : vector<1x128xf32> to vector<16x128xf32>
    %14 = arith.addf %12, %13 : vector<16x128xf32>
    %c0_9 = arith.constant 0 : index
    %c0_10 = arith.constant 0 : index
    %15 = vector.load %arg2[%c0_9, %c0_10] : memref<16x128xf32, #tpu.memory_space<vmem>>, vector<16x128xf32>
    %c0_11 = arith.constant 0 : index
    %c0_12 = arith.constant 0 : index
    %16 = vector.load %arg3[%c0_11, %c0_12] : memref<128x128xf32, #tpu.memory_space<vmem>>, vector<128x128xf32>
    %cst_13 = arith.constant dense<0.000000e+00> : vector<16x128xf32>
    %17 = tpu.matmul %15, %16, %cst_13 {dimension_numbers = #tpu.dot_dimension_numbers<[1], [0], [0], [1], [0, 0, 1, 1], [], []>} : vector<16x128xf32>, vector<128x128xf32>, vector<16x128xf32> -> vector<16x128xf32>
    %18 = vector.broadcast %1 : vector<1x128xf32> to vector<16x128xf32>
    %19 = arith.addf %17, %18 : vector<16x128xf32>
    %cst_14 = arith.constant 0.000000e+00 : f32
    %20 = vector.broadcast %cst_14 : f32 to vector<16x128xf32>
    %21 = arith.maximumf %19, %20 : vector<16x128xf32>
    %c0_15 = arith.constant 0 : index
    %c0_16 = arith.constant 0 : index
    %22 = vector.load %arg4[%c0_15, %c0_16] : memref<128x128xf32, #tpu.memory_space<vmem>>, vector<128x128xf32>
    %cst_17 = arith.constant dense<0.000000e+00> : vector<16x128xf32>
    %23 = tpu.matmul %21, %22, %cst_17 {dimension_numbers = #tpu.dot_dimension_numbers<[1], [0], [0], [1], [0, 0, 1, 1], [], []>} : vector<16x128xf32>, vector<128x128xf32>, vector<16x128xf32> -> vector<16x128xf32>
    %24 = vector.broadcast %2 : vector<1x128xf32> to vector<16x128xf32>
    %25 = arith.addf %23, %24 : vector<16x128xf32>
    %26 = arith.mulf %14, %25 : vector<16x128xf32>
    %c0_18 = arith.constant 0 : index
    %c0_19 = arith.constant 0 : index
    %27 = vector.load %arg5[%c0_18, %c0_19] : memref<128x128xf32, #tpu.memory_space<vmem>>, vector<128x128xf32>
    %cst_20 = arith.constant dense<0.000000e+00> : vector<16x128xf32>
    %28 = tpu.matmul %26, %27, %cst_20 {dimension_numbers = #tpu.dot_dimension_numbers<[1], [0], [0], [1], [0, 0, 1, 1], [], []>} : vector<16x128xf32>, vector<128x128xf32>, vector<16x128xf32> -> vector<16x128xf32>
    %29 = vector.broadcast %3 : vector<1x128xf32> to vector<16x128xf32>
    %30 = arith.addf %28, %29 : vector<16x128xf32>
    %cst_21 = arith.constant 0.000000e+00 : f32
    %31 = vector.broadcast %cst_21 : f32 to vector<16x128xf32>
    %32 = arith.maximumf %30, %31 : vector<16x128xf32>
    %c0_22 = arith.constant 0 : index
    %c0_23 = arith.constant 0 : index
    %33 = vector.load %arg6[%c0_22, %c0_23] : memref<128x128xf32, #tpu.memory_space<vmem>>, vector<128x128xf32>
    %cst_24 = arith.constant dense<0.000000e+00> : vector<16x128xf32>
    %34 = tpu.matmul %32, %33, %cst_24 {dimension_numbers = #tpu.dot_dimension_numbers<[1], [0], [0], [1], [0, 0, 1, 1], [], []>} : vector<16x128xf32>, vector<128x128xf32>, vector<16x128xf32> -> vector<16x128xf32>
    %c0_25 = arith.constant 0 : index
    %c0_26 = arith.constant 0 : index
    %35 = vector.load %arg8[%c0_25, %c0_26] : memref<1x128xf32, #tpu.memory_space<vmem>>, vector<1x128xf32>
    %36 = vector.broadcast %35 : vector<1x128xf32> to vector<16x128xf32>
    %37 = arith.addf %34, %36 : vector<16x128xf32>
    %c0_27 = arith.constant 0 : index
    %c0_28 = arith.constant 0 : index
    %38 = vector.load %arg9[%c0_27, %c0_28] : memref<16x128xf32, #tpu.memory_space<vmem>>, vector<16x128xf32>
    tpu.vector_store %arg9[%c0_27, %c0_28], %37 {strides = array<i32>} : memref<16x128xf32, #tpu.memory_space<vmem>>, vector<16x128xf32>,
    return
  }
  func.func @transform_0(%arg0: i32) -> (i32, i32) {
    %c0_i32 = arith.constant 0 : i32
    %c0_i32_0 = arith.constant 0 : i32
    return %arg0, %c0_i32 : i32, i32
  }
  func.func @transform_1(%arg0: i32) -> (i32, i32) {
    %c0_i32 = arith.constant 0 : i32
    %c0_i32_0 = arith.constant 0 : i32
    return %arg0, %c0_i32 : i32, i32
  }
  func.func @transform_2(%arg0: i32) -> (i32, i32) {
    %c0_i32 = arith.constant 0 : i32
    %c0_i32_0 = arith.constant 0 : i32
    %c0_i32_1 = arith.constant 0 : i32
    return %c0_i32, %c0_i32_0 : i32, i32
  }
  func.func @transform_3(%arg0: i32) -> (i32, i32) {
    %c0_i32 = arith.constant 0 : i32
    %c0_i32_0 = arith.constant 0 : i32
    %c0_i32_1 = arith.constant 0 : i32
    return %c0_i32, %c0_i32_0 : i32, i32
  }
  func.func @transform_4(%arg0: i32) -> (i32, i32) {
    %c0_i32 = arith.constant 0 : i32
    %c0_i32_0 = arith.constant 0 : i32
    %c0_i32_1 = arith.constant 0 : i32
    return %c0_i32, %c0_i32_0 : i32, i32
  }
  func.func @transform_5(%arg0: i32) -> (i32, i32) {
    %c0_i32 = arith.constant 0 : i32
    %c0_i32_0 = arith.constant 0 : i32
    %c0_i32_1 = arith.constant 0 : i32
    return %c0_i32, %c0_i32_0 : i32, i32
  }
  func.func @transform_6(%arg0: i32) -> (i32, i32) {
    %c0_i32 = arith.constant 0 : i32
    %c0_i32_0 = arith.constant 0 : i32
    %c0_i32_1 = arith.constant 0 : i32
    return %c0_i32, %c0_i32_0 : i32, i32
  }
  func.func @transform_7(%arg0: i32) -> (i32, i32) {
    %c0_i32 = arith.constant 0 : i32
    %c0_i32_0 = arith.constant 0 : i32
    %c0_i32_1 = arith.constant 0 : i32
    return %c0_i32, %c0_i32_0 : i32, i32
  }
  func.func @transform_8(%arg0: i32) -> (i32, i32) {
    %c0_i32 = arith.constant 0 : i32
    %c0_i32_0 = arith.constant 0 : i32
    return %arg0, %c0_i32 : i32, i32
  }
}

</mosaic_0001>

<llo_original>
// kernel: tpu_custom_call.1
$region0: #{tpu_custom_call.1}
  #allocation0 [shape = 'u32[]', space=smem, size = 0x4, offset = 0x4, fixed_abs, tag = 'smem constant byte address 0x4 - core index']
  #allocation1 [shape = 'u32[144,128]{1,0:T(1,128)}', space=vmem, size = 0x12000, scoped, tag = 'internal scratch']
  %s0 = inlined_call_operand.hbm [shape: f32[16,128], index: 0, kind: input, shape index: {}]
  %s1 = inlined_call_operand.hbm [shape: f32[16,128], index: 1, kind: input, shape index: {}]
  %s2 = inlined_call_operand.hbm [shape: f32[128,128], index: 2, kind: input, shape index: {}]
  %s3 = inlined_call_operand.hbm [shape: f32[128,128], index: 3, kind: input, shape index: {}]
  %s4 = inlined_call_operand.hbm [shape: f32[128,128], index: 4, kind: input, shape index: {}]
  %s5 = inlined_call_operand.hbm [shape: f32[128,128], index: 5, kind: input, shape index: {}]
  %s6 = inlined_call_operand.vmem [shape: f32[3,128], index: 6, kind: input, shape index: {}]
  %s7 = inlined_call_operand.vmem [shape: f32[1,128], index: 7, kind: input, shape index: {}]
  %s8 = inlined_call_operand.hbm [shape: f32[16,128], index: 8, kind: output, shape index: {}]
  %s9 = sld [smem:[#allocation0]]
  $region66: #{tpu_custom_call.1} parent=0
    _
  %s11 = ssub.s32 1, %s9
  %s12 = scalar_select 0, %s11, %s9
  $region1: #{tpu_custom_call.1} parent=0
    #allocation2 [shape = 'u8[8192]{0}', space=vmem, size = 0x2000, scoped, tag = 'input window, operand 0, single buffered']
    #allocation3 [shape = 's32[1]{0}', space=sflag, size = 0x4, scoped, tag = 'scoped memory for tpu_custom_call.1']
    #allocation4 [shape = 's32[1]{0}', space=sflag, size = 0x4, scoped, tag = 'scoped memory for tpu_custom_call.1']
    #allocation5 [shape = 'u8[8192]{0}', space=vmem, size = 0x2000, scoped, tag = 'input window, operand 1, single buffered']
    #allocation6 [shape = 's32[1]{0}', space=sflag, size = 0x4, scoped, tag = 'scoped memory for tpu_custom_call.1']
    #allocation7 [shape = 'u8[65536]{0}', space=vmem, size = 0x10000, scoped, tag = 'input window, operand 2, single buffered']
    #allocation8 [shape = 'u8[65536]{0}', space=vmem, size = 0x10000, scoped, tag = 'input window, operand 3, single buffered']
    #allocation9 [shape = 's32[1]{0}', space=sflag, size = 0x4, scoped, tag = 'scoped memory for tpu_custom_call.1']
    #allocation10 [shape = 'u8[65536]{0}', space=vmem, size = 0x10000, scoped, tag = 'input window, operand 4, single buffered']
    #allocation11 [shape = 'u8[65536]{0}', space=vmem, size = 0x10000, scoped, tag = 'input window, operand 5, single buffered']
    #allocation12 [shape = 's32[1]{0}', space=sflag, size = 0x4, scoped, tag = 'scoped memory for tpu_custom_call.1']
    #allocation13 [shape = 'u8[8192]{0}', space=vmem, size = 0x2000, scoped, tag = 'output window, operand 0, single buffered']
    %13 = vsyncpa [#allocation3], 0
    %14 = vsyncpa [#allocation6], 0
    %15 = vsyncpa [#allocation9], 0
    %16 = vsyncpa [#allocation12], 0
    %17 = vsyncpa [#allocation4], 0
    // Predicated region
    $region2: #{tpu_custom_call.1} parent=1 // pred_check
      _
    $region3: #{tpu_custom_call.1} parent=1 // pred_check_branch
      %19 = sbr.rel (0) target = $region5
    $region4: #{tpu_custom_call.1} parent=1 // pred_region
      %s21 = ssub.s32 256, 256
      %22 = vsyncadd [#allocation3], %s21
      %s23 = sshll.u32 [#allocation2], 4
      %s24 = int_to_ptr.vmem [resolvable:$true] %s23
      %29 = dma.hbm_to_vmem [thread:$0]  %s0, 256, %s24, [#allocation3], 128, 128, 8
    $region5: #{tpu_custom_call.1} parent=1 // pred_fallthru
      _
    // Predicated region
    $region6: #{tpu_custom_call.1} parent=1 // pred_check
      _
    $region7: #{tpu_custom_call.1} parent=1 // pred_check_branch
      %31 = sbr.rel (0) target = $region9
    $region8: #{tpu_custom_call.1} parent=1 // pred_region
      %s33 = ssub.s32 256, 256
      %34 = vsyncadd [#allocation6], %s33
      %s35 = sshll.u32 [#allocation5], 4
      %s36 = int_to_ptr.vmem [resolvable:$true] %s35
      %41 = dma.hbm_to_vmem [thread:$0]  %s1, 256, %s36, [#allocation6], 128, 128, 8
    $region9: #{tpu_custom_call.1} parent=1 // pred_fallthru
      _
    // Predicated region
    $region10: #{tpu_custom_call.1} parent=1 // pred_check
      _
    $region11: #{tpu_custom_call.1} parent=1 // pred_check_branch
      %43 = sbr.rel (0) target = $region13
    $region12: #{tpu_custom_call.1} parent=1 // pred_region
      %s45 = ssub.s32 2048, 2048
      %46 = vsyncadd [#allocation6], %s45
      %s47 = sshll.u32 [#allocation7], 4
      %s48 = int_to_ptr.vmem [resolvable:$true] %s47
      %53 = dma.hbm_to_vmem [thread:$0]  %s2, 2048, %s48, [#allocation6], 128, 128, 8
    $region13: #{tpu_custom_call.1} parent=1 // pred_fallthru
      _
    // Predicated region
    $region14: #{tpu_custom_call.1} parent=1 // pred_check
      _
    $region15: #{tpu_custom_call.1} parent=1 // pred_check_branch
      %55 = sbr.rel (0) target = $region17
    $region16: #{tpu_custom_call.1} parent=1 // pred_region
      %s57 = ssub.s32 2048, 2048
      %58 = vsyncadd [#allocation9], %s57
      %s59 = sshll.u32 [#allocation8], 4
      %s60 = int_to_ptr.vmem [resolvable:$true] %s59
      %65 = dma.hbm_to_vmem [thread:$0]  %s3, 2048, %s60, [#allocation9], 128, 128, 8
    $region17: #{tpu_custom_call.1} parent=1 // pred_fallthru
      _
    // Predicated region
    $region18: #{tpu_custom_call.1} parent=1 // pred_check
      _
    $region19: #{tpu_custom_call.1} parent=1 // pred_check_branch
      %67 = sbr.rel (0) target = $region21
    $region20: #{tpu_custom_call.1} parent=1 // pred_region
      %s69 = ssub.s32 2048, 2048
      %70 = vsyncadd [#allocation9], %s69
      %s71 = sshll.u32 [#allocation10], 4
      %s72 = int_to_ptr.vmem [resolvable:$true] %s71
      %77 = dma.hbm_to_vmem [thread:$0]  %s4, 2048, %s72, [#allocation9], 128, 128, 8
    $region21: #{tpu_custom_call.1} parent=1 // pred_fallthru
      _
    // Predicated region
    $region22: #{tpu_custom_call.1} parent=1 // pred_check
      _
    $region23: #{tpu_custom_call.1} parent=1 // pred_check_branch
      %79 = sbr.rel (0) target = $region25
    $region24: #{tpu_custom_call.1} parent=1 // pred_region
      %s81 = ssub.s32 2048, 2048
      %82 = vsyncadd [#allocation12], %s81
      %s83 = sshll.u32 [#allocation11], 4
      %s84 = int_to_ptr.vmem [resolvable:$true] %s83
      %89 = dma.hbm_to_vmem [thread:$0]  %s5, 2048, %s84, [#allocation12], 128, 128, 8
    $region25: #{tpu_custom_call.1} parent=1 // pred_fallthru
      _
    // Predicated region
    $region26: #{tpu_custom_call.1} parent=1 // pred_check
      _
    $region27: #{tpu_custom_call.1} parent=1 // pred_check_branch
      %91 = sbr.rel (0) target = $region29
    $region28: #{tpu_custom_call.1} parent=1 // pred_region
      _
    $region29: #{tpu_custom_call.1} parent=1 // pred_fallthru
      _
    // Predicated region
    $region30: #{tpu_custom_call.1} parent=1 // pred_check
      _
    $region31: #{tpu_custom_call.1} parent=1 // pred_check_branch
      %93 = sbr.rel (0) target = $region33
    $region32: #{tpu_custom_call.1} parent=1 // pred_region
      _
    $region33: #{tpu_custom_call.1} parent=1 // pred_fallthru
      _
    // Predicated region
    $region34: #{tpu_custom_call.1} parent=1 // pred_check
      _
    $region35: #{tpu_custom_call.1} parent=1 // pred_check_branch
      %95 = sbr.rel (0) target = $region37
    $region36: #{tpu_custom_call.1} parent=1 // pred_region
      %96 = dma.done [#allocation3], 256
    $region37: #{tpu_custom_call.1} parent=1 // pred_fallthru
      _
    // Predicated region
    $region38: #{tpu_custom_call.1} parent=1 // pred_check
      _
    $region39: #{tpu_custom_call.1} parent=1 // pred_check_branch
      %98 = sbr.rel (0) target = $region41
    $region40: #{tpu_custom_call.1} parent=1 // pred_region
      %99 = dma.done [#allocation6], 256
    $region41: #{tpu_custom_call.1} parent=1 // pred_fallthru
      _
    // Predicated region
    $region42: #{tpu_custom_call.1} parent=1 // pred_check
      _
    $region43: #{tpu_custom_call.1} parent=1 // pred_check_branch
      %101 = sbr.rel (0) target = $region45
    $region44: #{tpu_custom_call.1} parent=1 // pred_region
      %102 = dma.done [#allocation6], 2048
    $region45: #{tpu_custom_call.1} parent=1 // pred_fallthru
      _
    // Predicated region
    $region46: #{tpu_custom_call.1} parent=1 // pred_check
      _
    $region47: #{tpu_custom_call.1} parent=1 // pred_check_branch
      %104 = sbr.rel (0) target = $region49
    $region48: #{tpu_custom_call.1} parent=1 // pred_region
      %105 = dma.done [#allocation9], 2048
    $region49: #{tpu_custom_call.1} parent=1 // pred_fallthru
      _
    // Predicated region
    $region50: #{tpu_custom_call.1} parent=1 // pred_check
      _
    $region51: #{tpu_custom_call.1} parent=1 // pred_check_branch
      %107 = sbr.rel (0) target = $region53
    $region52: #{tpu_custom_call.1} parent=1 // pred_region
      %108 = dma.done [#allocation9], 2048
    $region53: #{tpu_custom_call.1} parent=1 // pred_fallthru
      _
    // Predicated region
    $region54: #{tpu_custom_call.1} parent=1 // pred_check
      _
    $region55: #{tpu_custom_call.1} parent=1 // pred_check_branch
      %110 = sbr.rel (0) target = $region57
    $region56: #{tpu_custom_call.1} parent=1 // pred_region
      %111 = dma.done [#allocation12], 2048
    $region57: #{tpu_custom_call.1} parent=1 // pred_fallthru
      _
    %v112 = vld [vmem:[%s6] sm:$0x7]
    %v113 = vld [vmem:[#allocation2] sm:$0xff]
    %v114 = vld [vmem:[#allocation2 + $0x8] sm:$0xff]
    %v115 = vld [vmem:[#allocation7] sm:$0xff]
    %v116 = vld [vmem:[#allocation7 + $0x8] sm:$0xff]
    %v117 = vld [vmem:[#allocation7 + $0x10] sm:$0xff]
    %v118 = vld [vmem:[#allocation7 + $0x18] sm:$0xff]
    %v119 = vld [vmem:[#allocation7 + $0x20] sm:$0xff]
    %v120 = vld [vmem:[#allocation7 + $0x28] sm:$0xff]
    %v121 = vld [vmem:[#allocation7 + $0x30] sm:$0xff]
    %v122 = vld [vmem:[#allocation7 + $0x38] sm:$0xff]
    %v123 = vld [vmem:[#allocation7 + $0x40] sm:$0xff]
    %v124 = vld [vmem:[#allocation7 + $0x48] sm:$0xff]
    %v125 = vld [vmem:[#allocation7 + $0x50] sm:$0xff]
    %v126 = vld [vmem:[#allocation7 + $0x58] sm:$0xff]
    %v127 = vld [vmem:[#allocation7 + $0x60] sm:$0xff]
    %v128 = vld [vmem:[#allocation7 + $0x68] sm:$0xff]
    %v129 = vld [vmem:[#allocation7 + $0x70] sm:$0xff]
    %v130 = vld [vmem:[#allocation7 + $0x78] sm:$0xff]
    %v131 = vlaneseq
    %v132 = vshrl.u32 %v131, 7
    %v133 = vsub.s32 0, %v132
    %v134 = vrot.slane %v112, %v133
    %135 = vmatprep.subr.mxu0 0.0
    %136 = vmatpush1.msra.mxu0 %v115
    %137 = vmatprep.subr.mxu0 0.0
    %138 = vmatpush1.msra.mxu0 %v116
    %139 = vmatprep.subr.mxu0 0.0
    %140 = vmatpush1.msra.mxu0 %v117
    %141 = vmatprep.subr.mxu0 0.0
    %142 = vmatpush1.msra.mxu0 %v118
    %143 = vmatprep.subr.mxu0 0.0
    %144 = vmatpush1.msra.mxu0 %v119
    %145 = vmatprep.subr.mxu0 0.0
    %146 = vmatpush1.msra.mxu0 %v120
    %147 = vmatprep.subr.mxu0 0.0
    %148 = vmatpush1.msra.mxu0 %v121
    %149 = vmatprep.subr.mxu0 0.0
    %150 = vmatpush1.msra.mxu0 %v122
    %151 = vmatprep.subr.mxu0 0.0
    %152 = vmatpush1.msra.mxu0 %v123
    %153 = vmatprep.subr.mxu0 0.0
    %154 = vmatpush1.msra.mxu0 %v124
    %155 = vmatprep.subr.mxu0 0.0
    %156 = vmatpush1.msra.mxu0 %v125
    %157 = vmatprep.subr.mxu0 0.0
    %158 = vmatpush1.msra.mxu0 %v126
    %159 = vmatprep.subr.mxu0 0.0
    %160 = vmatpush1.msra.mxu0 %v127
    %161 = vmatprep.subr.mxu0 0.0
    %162 = vmatpush1.msra.mxu0 %v128
    %163 = vmatprep.subr.mxu0 0.0
    %164 = vmatpush1.msra.mxu0 %v129
    %165 = vmatprep.subr.mxu0 0.0
    %166 = vmatpush1.msra.mxu0 %v130
    %167 = vmatprep.subr.mxu0 0.0
    %168 = vmatpush1.msra.mxu0 0.0
    %169 = vmatprep.subr.mxu0 0.0
    %170 = vmatpush1.msra.mxu0 0.0
    %171 = vmatprep.subr.mxu0 0.0
    %172 = vmatpush1.msra.mxu0 0.0
    %173 = vmatprep.subr.mxu0 0.0
    %174 = vmatpush1.msra.mxu0 0.0
    %175 = vmatprep.subr.mxu0 0.0
    %176 = vmatpush1.msra.mxu0 0.0
    %177 = vmatprep.subr.mxu0 0.0
    %178 = vmatpush1.msra.mxu0 0.0
    %179 = vmatprep.subr.mxu0 0.0
    %180 = vmatpush1.msra.mxu0 0.0
    %181 = vmatprep.subr.mxu0 0.0
    %182 = vmatpush1.msra.mxu0 0.0
    %183 = vmatprep.subr.mxu0 0.0
    %184 = vmatpush1.msra.mxu0 0.0
    %185 = vmatprep.subr.mxu0 0.0
    %186 = vmatpush1.msra.mxu0 0.0
    %187 = vmatprep.subr.mxu0 0.0
    %188 = vmatpush1.msra.mxu0 0.0
    %189 = vmatprep.subr.mxu0 0.0
    %190 = vmatpush1.msra.mxu0 0.0
    %191 = vmatprep.subr.mxu0 0.0
    %192 = vmatpush1.msra.mxu0 0.0
    %193 = vmatprep.subr.mxu0 0.0
    %194 = vmatpush1.msra.mxu0 0.0
    %195 = vmatprep.subr.mxu0 0.0
    %196 = vmatpush1.msra.mxu0 0.0
    %197 = vmatprep.subr.mxu0 0.0
    %198 = vmatpush1.msra.mxu0 0.0
    %199 = vmatprep.mubr.f32.mxu0 0.0
    %200 = vmatmul.mubr.f32.gmra.mrb[0].mxu0 %v113
    %v201 = vpop.f32.mrb[0].mxu0
    %v202 = vadd.f32 %v134, %v201
    %v203 = vpop.f32.mrb[0].mxu0
    %204 = vmatprep.mubr.f32.mxu0 0.0
    %205 = vmatmul.mubr.f32.gmra.mrb[0].mxu0 %v114
    %v206 = vpop.f32.mrb[0].mxu0
    %v207 = vadd.f32 %v134, %v206
    %v208 = vpop.f32.mrb[0].mxu0
    %209 = vdwg.mxu0
    %v210 = vmax.f32 %v202, 0.0
    %v211 = vmax.f32 %v207, 0.0
    %v212 = vld [vmem:[#allocation8] sm:$0xff]
    %v213 = vld [vmem:[#allocation8 + $0x8] sm:$0xff]
    %v214 = vld [vmem:[#allocation8 + $0x10] sm:$0xff]
    %v215 = vld [vmem:[#allocation8 + $0x18] sm:$0xff]
    %v216 = vld [vmem:[#allocation8 + $0x20] sm:$0xff]
    %v217 = vld [vmem:[#allocation8 + $0x28] sm:$0xff]
    %v218 = vld [vmem:[#allocation8 + $0x30] sm:$0xff]
    %v219 = vld [vmem:[#allocation8 + $0x38] sm:$0xff]
    %v220 = vld [vmem:[#allocation8 + $0x40] sm:$0xff]
    %v221 = vld [vmem:[#allocation8 + $0x48] sm:$0xff]
    %v222 = vld [vmem:[#allocation8 + $0x50] sm:$0xff]
    %v223 = vld [vmem:[#allocation8 + $0x58] sm:$0xff]
    %v224 = vld [vmem:[#allocation8 + $0x60] sm:$0xff]
    %v225 = vld [vmem:[#allocation8 + $0x68] sm:$0xff]
    %v226 = vld [vmem:[#allocation8 + $0x70] sm:$0xff]
    %v227 = vld [vmem:[#allocation8 + $0x78] sm:$0xff]
    %v228 = vlaneseq
    %v229 = vshrl.u32 %v228, 7
    %v230 = vsub.s32 1, %v229
    %v231 = vrot.slane %v112, %v230
    %232 = vmatprep.subr.mxu0 0.0
    %233 = vmatpush1.msra.mxu0 %v212
    %234 = vmatprep.subr.mxu0 0.0
    %235 = vmatpush1.msra.mxu0 %v213
    %236 = vmatprep.subr.mxu0 0.0
    %237 = vmatpush1.msra.mxu0 %v214
    %238 = vmatprep.subr.mxu0 0.0
    %239 = vmatpush1.msra.mxu0 %v215
    %240 = vmatprep.subr.mxu0 0.0
    %241 = vmatpush1.msra.mxu0 %v216
    %242 = vmatprep.subr.mxu0 0.0
    %243 = vmatpush1.msra.mxu0 %v217
    %244 = vmatprep.subr.mxu0 0.0
    %245 = vmatpush1.msra.mxu0 %v218
    %246 = vmatprep.subr.mxu0 0.0
    %247 = vmatpush1.msra.mxu0 %v219
    %248 = vmatprep.subr.mxu0 0.0
    %249 = vmatpush1.msra.mxu0 %v220
    %250 = vmatprep.subr.mxu0 0.0
    %251 = vmatpush1.msra.mxu0 %v221
    %252 = vmatprep.subr.mxu0 0.0
    %253 = vmatpush1.msra.mxu0 %v222
    %254 = vmatprep.subr.mxu0 0.0
    %255 = vmatpush1.msra.mxu0 %v223
    %256 = vmatprep.subr.mxu0 0.0
    %257 = vmatpush1.msra.mxu0 %v224
    %258 = vmatprep.subr.mxu0 0.0
    %259 = vmatpush1.msra.mxu0 %v225
    %260 = vmatprep.subr.mxu0 0.0
    %261 = vmatpush1.msra.mxu0 %v226
    %262 = vmatprep.subr.mxu0 0.0
    %263 = vmatpush1.msra.mxu0 %v227
    %264 = vmatprep.subr.mxu0 0.0
    %265 = vmatpush1.msra.mxu0 0.0
    %266 = vmatprep.subr.mxu0 0.0
    %267 = vmatpush1.msra.mxu0 0.0
    %268 = vmatprep.subr.mxu0 0.0
    %269 = vmatpush1.msra.mxu0 0.0
    %270 = vmatprep.subr.mxu0 0.0
    %271 = vmatpush1.msra.mxu0 0.0
    %272 = vmatprep.subr.mxu0 0.0
    %273 = vmatpush1.msra.mxu0 0.0
    %274 = vmatprep.subr.mxu0 0.0
    %275 = vmatpush1.msra.mxu0 0.0
    %276 = vmatprep.subr.mxu0 0.0
    %277 = vmatpush1.msra.mxu0 0.0
    %278 = vmatprep.subr.mxu0 0.0
    %279 = vmatpush1.msra.mxu0 0.0
    %280 = vmatprep.subr.mxu0 0.0
    %281 = vmatpush1.msra.mxu0 0.0
    %282 = vmatprep.subr.mxu0 0.0
    %283 = vmatpush1.msra.mxu0 0.0
    %284 = vmatprep.subr.mxu0 0.0
    %285 = vmatpush1.msra.mxu0 0.0
    %286 = vmatprep.subr.mxu0 0.0
    %287 = vmatpush1.msra.mxu0 0.0
    %288 = vmatprep.subr.mxu0 0.0
    %289 = vmatpush1.msra.mxu0 0.0
    %290 = vmatprep.subr.mxu0 0.0
    %291 = vmatpush1.msra.mxu0 0.0
    %292 = vmatprep.subr.mxu0 0.0
    %293 = vmatpush1.msra.mxu0 0.0
    %294 = vmatprep.subr.mxu0 0.0
    %295 = vmatpush1.msra.mxu0 0.0
    %296 = vmatprep.mubr.f32.mxu0 0.0
    %297 = vmatmul.mubr.f32.gmra.mrb[0].mxu0 %v210
    %v298 = vpop.f32.mrb[0].mxu0
    %v299 = vadd.f32 %v231, %v298
    %v300 = vpop.f32.mrb[0].mxu0
    %301 = vmatprep.mubr.f32.mxu0 0.0
    %302 = vmatmul.mubr.f32.gmra.mrb[0].mxu0 %v211
    %v303 = vpop.f32.mrb[0].mxu0
    %v304 = vadd.f32 %v231, %v303
    %v305 = vpop.f32.mrb[0].mxu0
    %306 = vdwg.mxu0
    %v307 = vld [vmem:[#allocation5] sm:$0xff]
    %v308 = vld [vmem:[#allocation5 + $0x8] sm:$0xff]
    %309 = vmatprep.subr.mxu0 0.0
    %310 = vmatpush1.msra.mxu0 %v115
    %311 = vmatprep.subr.mxu0 0.0
    %312 = vmatpush1.msra.mxu0 %v116
    %313 = vmatprep.subr.mxu0 0.0
    %314 = vmatpush1.msra.mxu0 %v117
    %315 = vmatprep.subr.mxu0 0.0
    %316 = vmatpush1.msra.mxu0 %v118
    %317 = vmatprep.subr.mxu0 0.0
    %318 = vmatpush1.msra.mxu0 %v119
    %319 = vmatprep.subr.mxu0 0.0
    %320 = vmatpush1.msra.mxu0 %v120
    %321 = vmatprep.subr.mxu0 0.0
    %322 = vmatpush1.msra.mxu0 %v121
    %323 = vmatprep.subr.mxu0 0.0
    %324 = vmatpush1.msra.mxu0 %v122
    %325 = vmatprep.subr.mxu0 0.0
    %326 = vmatpush1.msra.mxu0 %v123
    %327 = vmatprep.subr.mxu0 0.0
    %328 = vmatpush1.msra.mxu0 %v124
    %329 = vmatprep.subr.mxu0 0.0
    %330 = vmatpush1.msra.mxu0 %v125
    %331 = vmatprep.subr.mxu0 0.0
    %332 = vmatpush1.msra.mxu0 %v126
    %333 = vmatprep.subr.mxu0 0.0
    %334 = vmatpush1.msra.mxu0 %v127
    %335 = vmatprep.subr.mxu0 0.0
    %336 = vmatpush1.msra.mxu0 %v128
    %337 = vmatprep.subr.mxu0 0.0
    %338 = vmatpush1.msra.mxu0 %v129
    %339 = vmatprep.subr.mxu0 0.0
    %340 = vmatpush1.msra.mxu0 %v130
    %341 = vmatprep.subr.mxu0 0.0
    %342 = vmatpush1.msra.mxu0 0.0
    %343 = vmatprep.subr.mxu0 0.0
    %344 = vmatpush1.msra.mxu0 0.0
    %345 = vmatprep.subr.mxu0 0.0
    %346 = vmatpush1.msra.mxu0 0.0
    %347 = vmatprep.subr.mxu0 0.0
    %348 = vmatpush1.msra.mxu0 0.0
    %349 = vmatprep.subr.mxu0 0.0
    %350 = vmatpush1.msra.mxu0 0.0
    %351 = vmatprep.subr.mxu0 0.0
    %352 = vmatpush1.msra.mxu0 0.0
    %353 = vmatprep.subr.mxu0 0.0
    %354 = vmatpush1.msra.mxu0 0.0
    %355 = vmatprep.subr.mxu0 0.0
    %356 = vmatpush1.msra.mxu0 0.0
    %357 = vmatprep.subr.mxu0 0.0
    %358 = vmatpush1.msra.mxu0 0.0
    %359 = vmatprep.subr.mxu0 0.0
    %360 = vmatpush1.msra.mxu0 0.0
    %361 = vmatprep.subr.mxu0 0.0
    %362 = vmatpush1.msra.mxu0 0.0
    %363 = vmatprep.subr.mxu0 0.0
    %364 = vmatpush1.msra.mxu0 0.0
    %365 = vmatprep.subr.mxu0 0.0
    %366 = vmatpush1.msra.mxu0 0.0
    %367 = vmatprep.subr.mxu0 0.0
    %368 = vmatpush1.msra.mxu0 0.0
    %369 = vmatprep.subr.mxu0 0.0
    %370 = vmatpush1.msra.mxu0 0.0
    %371 = vmatprep.subr.mxu0 0.0
    %372 = vmatpush1.msra.mxu0 0.0
    %373 = vmatprep.mubr.f32.mxu0 0.0
    %374 = vmatmul.mubr.f32.gmra.mrb[0].mxu0 %v307
    %v375 = vpop.f32.mrb[0].mxu0
    %v376 = vadd.f32 %v134, %v375
    %v377 = vpop.f32.mrb[0].mxu0
    %378 = vmatprep.mubr.f32.mxu0 0.0
    %379 = vmatmul.mubr.f32.gmra.mrb[0].mxu0 %v308
    %v380 = vpop.f32.mrb[0].mxu0
    %v381 = vadd.f32 %v134, %v380
    %v382 = vpop.f32.mrb[0].mxu0
    %383 = vdwg.mxu0
    %v384 = vmax.f32 %v376, 0.0
    %v385 = vmax.f32 %v381, 0.0
    %386 = vmatprep.subr.mxu0 0.0
    %387 = vmatpush1.msra.mxu0 %v212
    %388 = vmatprep.subr.mxu0 0.0
    %389 = vmatpush1.msra.mxu0 %v213
    %390 = vmatprep.subr.mxu0 0.0
    %391 = vmatpush1.msra.mxu0 %v214
    %392 = vmatprep.subr.mxu0 0.0
    %393 = vmatpush1.msra.mxu0 %v215
    %394 = vmatprep.subr.mxu0 0.0
    %395 = vmatpush1.msra.mxu0 %v216
    %396 = vmatprep.subr.mxu0 0.0
    %397 = vmatpush1.msra.mxu0 %v217
    %398 = vmatprep.subr.mxu0 0.0
    %399 = vmatpush1.msra.mxu0 %v218
    %400 = vmatprep.subr.mxu0 0.0
    %401 = vmatpush1.msra.mxu0 %v219
    %402 = vmatprep.subr.mxu0 0.0
    %403 = vmatpush1.msra.mxu0 %v220
    %404 = vmatprep.subr.mxu0 0.0
    %405 = vmatpush1.msra.mxu0 %v221
    %406 = vmatprep.subr.mxu0 0.0
    %407 = vmatpush1.msra.mxu0 %v222
    %408 = vmatprep.subr.mxu0 0.0
    %409 = vmatpush1.msra.mxu0 %v223
    %410 = vmatprep.subr.mxu0 0.0
    %411 = vmatpush1.msra.mxu0 %v224
    %412 = vmatprep.subr.mxu0 0.0
    %413 = vmatpush1.msra.mxu0 %v225
    %414 = vmatprep.subr.mxu0 0.0
    %415 = vmatpush1.msra.mxu0 %v226
    %416 = vmatprep.subr.mxu0 0.0
    %417 = vmatpush1.msra.mxu0 %v227
    %418 = vmatprep.subr.mxu0 0.0
    %419 = vmatpush1.msra.mxu0 0.0
    %420 = vmatprep.subr.mxu0 0.0
    %421 = vmatpush1.msra.mxu0 0.0
    %422 = vmatprep.subr.mxu0 0.0
    %423 = vmatpush1.msra.mxu0 0.0
    %424 = vmatprep.subr.mxu0 0.0
    %425 = vmatpush1.msra.mxu0 0.0
    %426 = vmatprep.subr.mxu0 0.0
    %427 = vmatpush1.msra.mxu0 0.0
    %428 = vmatprep.subr.mxu0 0.0
    %429 = vmatpush1.msra.mxu0 0.0
    %430 = vmatprep.subr.mxu0 0.0
    %431 = vmatpush1.msra.mxu0 0.0
    %432 = vmatprep.subr.mxu0 0.0
    %433 = vmatpush1.msra.mxu0 0.0
    %434 = vmatprep.subr.mxu0 0.0
    %435 = vmatpush1.msra.mxu0 0.0
    %436 = vmatprep.subr.mxu0 0.0
    %437 = vmatpush1.msra.mxu0 0.0
    %438 = vmatprep.subr.mxu0 0.0
    %439 = vmatpush1.msra.mxu0 0.0
    %440 = vmatprep.subr.mxu0 0.0
    %441 = vmatpush1.msra.mxu0 0.0
    %442 = vmatprep.subr.mxu0 0.0
    %443 = vmatpush1.msra.mxu0 0.0
    %444 = vmatprep.subr.mxu0 0.0
    %445 = vmatpush1.msra.mxu0 0.0
    %446 = vmatprep.subr.mxu0 0.0
    %447 = vmatpush1.msra.mxu0 0.0
    %448 = vmatprep.subr.mxu0 0.0
    %449 = vmatpush1.msra.mxu0 0.0
    %450 = vmatprep.mubr.f32.mxu0 0.0
    %451 = vmatmul.mubr.f32.gmra.mrb[0].mxu0 %v384
    %v452 = vpop.f32.mrb[0].mxu0
    %v453 = vadd.f32 %v231, %v452
    %v454 = vpop.f32.mrb[0].mxu0
    %455 = vmatprep.mubr.f32.mxu0 0.0
    %456 = vmatmul.mubr.f32.gmra.mrb[0].mxu0 %v385
    %v457 = vpop.f32.mrb[0].mxu0
    %v458 = vadd.f32 %v231, %v457
    %v459 = vpop.f32.mrb[0].mxu0
    %460 = vdwg.mxu0
    %v461 = vmul.f32 %v299, %v453
    %v462 = vmul.f32 %v304, %v458
    %v463 = vld [vmem:[#allocation10] sm:$0xff]
    %v464 = vld [vmem:[#allocation10 + $0x8] sm:$0xff]
    %v465 = vld [vmem:[#allocation10 + $0x10] sm:$0xff]
    %v466 = vld [vmem:[#allocation10 + $0x18] sm:$0xff]
    %v467 = vld [vmem:[#allocation10 + $0x20] sm:$0xff]
    %v468 = vld [vmem:[#allocation10 + $0x28] sm:$0xff]
    %v469 = vld [vmem:[#allocation10 + $0x30] sm:$0xff]
    %v470 = vld [vmem:[#allocation10 + $0x38] sm:$0xff]
    %v471 = vld [vmem:[#allocation10 + $0x40] sm:$0xff]
    %v472 = vld [vmem:[#allocation10 + $0x48] sm:$0xff]
    %v473 = vld [vmem:[#allocation10 + $0x50] sm:$0xff]
    %v474 = vld [vmem:[#allocation10 + $0x58] sm:$0xff]
    %v475 = vld [vmem:[#allocation10 + $0x60] sm:$0xff]
    %v476 = vld [vmem:[#allocation10 + $0x68] sm:$0xff]
    %v477 = vld [vmem:[#allocation10 + $0x70] sm:$0xff]
    %v478 = vld [vmem:[#allocation10 + $0x78] sm:$0xff]
    %v479 = vlaneseq
    %v480 = vshrl.u32 %v479, 7
    %v481 = vsub.s32 2, %v480
    %v482 = vrot.slane %v112, %v481
    %483 = vmatprep.subr.mxu0 0.0
    %484 = vmatpush1.msra.mxu0 %v463
    %485 = vmatprep.subr.mxu0 0.0
    %486 = vmatpush1.msra.mxu0 %v464
    %487 = vmatprep.subr.mxu0 0.0
    %488 = vmatpush1.msra.mxu0 %v465
    %489 = vmatprep.subr.mxu0 0.0
    %490 = vmatpush1.msra.mxu0 %v466
    %491 = vmatprep.subr.mxu0 0.0
    %492 = vmatpush1.msra.mxu0 %v467
    %493 = vmatprep.subr.mxu0 0.0
    %494 = vmatpush1.msra.mxu0 %v468
    %495 = vmatprep.subr.mxu0 0.0
    %496 = vmatpush1.msra.mxu0 %v469
    %497 = vmatprep.subr.mxu0 0.0
    %498 = vmatpush1.msra.mxu0 %v470
    %499 = vmatprep.subr.mxu0 0.0
    %500 = vmatpush1.msra.mxu0 %v471
    %501 = vmatprep.subr.mxu0 0.0
    %502 = vmatpush1.msra.mxu0 %v472
    %503 = vmatprep.subr.mxu0 0.0
    %504 = vmatpush1.msra.mxu0 %v473
    %505 = vmatprep.subr.mxu0 0.0
    %506 = vmatpush1.msra.mxu0 %v474
    %507 = vmatprep.subr.mxu0 0.0
    %508 = vmatpush1.msra.mxu0 %v475
    %509 = vmatprep.subr.mxu0 0.0
    %510 = vmatpush1.msra.mxu0 %v476
    %511 = vmatprep.subr.mxu0 0.0
    %512 = vmatpush1.msra.mxu0 %v477
    %513 = vmatprep.subr.mxu0 0.0
    %514 = vmatpush1.msra.mxu0 %v478
    %515 = vmatprep.subr.mxu0 0.0
    %516 = vmatpush1.msra.mxu0 0.0
    %517 = vmatprep.subr.mxu0 0.0
    %518 = vmatpush1.msra.mxu0 0.0
    %519 = vmatprep.subr.mxu0 0.0
    %520 = vmatpush1.msra.mxu0 0.0
    %521 = vmatprep.subr.mxu0 0.0
    %522 = vmatpush1.msra.mxu0 0.0
    %523 = vmatprep.subr.mxu0 0.0
    %524 = vmatpush1.msra.mxu0 0.0
    %525 = vmatprep.subr.mxu0 0.0
    %526 = vmatpush1.msra.mxu0 0.0
    %527 = vmatprep.subr.mxu0 0.0
    %528 = vmatpush1.msra.mxu0 0.0
    %529 = vmatprep.subr.mxu0 0.0
    %530 = vmatpush1.msra.mxu0 0.0
    %531 = vmatprep.subr.mxu0 0.0
    %532 = vmatpush1.msra.mxu0 0.0
    %533 = vmatprep.subr.mxu0 0.0
    %534 = vmatpush1.msra.mxu0 0.0
    %535 = vmatprep.subr.mxu0 0.0
    %536 = vmatpush1.msra.mxu0 0.0
    %537 = vmatprep.subr.mxu0 0.0
    %538 = vmatpush1.msra.mxu0 0.0
    %539 = vmatprep.subr.mxu0 0.0
    %540 = vmatpush1.msra.mxu0 0.0
    %541 = vmatprep.subr.mxu0 0.0
    %542 = vmatpush1.msra.mxu0 0.0
    %543 = vmatprep.subr.mxu0 0.0
    %544 = vmatpush1.msra.mxu0 0.0
    %545 = vmatprep.subr.mxu0 0.0
    %546 = vmatpush1.msra.mxu0 0.0
    %547 = vmatprep.mubr.f32.mxu0 0.0
    %548 = vmatmul.mubr.f32.gmra.mrb[0].mxu0 %v461
    %v549 = vpop.f32.mrb[0].mxu0
    %v550 = vadd.f32 %v482, %v549
    %v551 = vpop.f32.mrb[0].mxu0
    %552 = vmatprep.mubr.f32.mxu0 0.0
    %553 = vmatmul.mubr.f32.gmra.mrb[0].mxu0 %v462
    %v554 = vpop.f32.mrb[0].mxu0
    %v555 = vadd.f32 %v482, %v554
    %v556 = vpop.f32.mrb[0].mxu0
    %557 = vdwg.mxu0
    %v558 = vmax.f32 %v550, 0.0
    %v559 = vmax.f32 %v555, 0.0
    %v560 = vld [vmem:[#allocation11] sm:$0xff]
    %v561 = vld [vmem:[#allocation11 + $0x8] sm:$0xff]
    %v562 = vld [vmem:[#allocation11 + $0x10] sm:$0xff]
    %v563 = vld [vmem:[#allocation11 + $0x18] sm:$0xff]
    %v564 = vld [vmem:[#allocation11 + $0x20] sm:$0xff]
    %v565 = vld [vmem:[#allocation11 + $0x28] sm:$0xff]
    %v566 = vld [vmem:[#allocation11 + $0x30] sm:$0xff]
    %v567 = vld [vmem:[#allocation11 + $0x38] sm:$0xff]
    %v568 = vld [vmem:[#allocation11 + $0x40] sm:$0xff]
    %v569 = vld [vmem:[#allocation11 + $0x48] sm:$0xff]
    %v570 = vld [vmem:[#allocation11 + $0x50] sm:$0xff]
    %v571 = vld [vmem:[#allocation11 + $0x58] sm:$0xff]
    %v572 = vld [vmem:[#allocation11 + $0x60] sm:$0xff]
    %v573 = vld [vmem:[#allocation11 + $0x68] sm:$0xff]
    %v574 = vld [vmem:[#allocation11 + $0x70] sm:$0xff]
    %v575 = vld [vmem:[#allocation11 + $0x78] sm:$0xff]
    %v576 = vld [vmem:[%s7] sm:$0x1]
    %v578 = vlaneseq
    %v579 = vshrl.u32 %v578, 7
    %v580 = vsub.s32 0, %v579
    %v581 = vrot.slane %v576, %v580
    %583 = vmatprep.subr.mxu0 0.0
    %584 = vmatpush1.msra.mxu0 %v560
    %585 = vmatprep.subr.mxu0 0.0
    %586 = vmatpush1.msra.mxu0 %v561
    %587 = vmatprep.subr.mxu0 0.0
    %588 = vmatpush1.msra.mxu0 %v562
    %589 = vmatprep.subr.mxu0 0.0
    %590 = vmatpush1.msra.mxu0 %v563
    %591 = vmatprep.subr.mxu0 0.0
    %592 = vmatpush1.msra.mxu0 %v564
    %593 = vmatprep.subr.mxu0 0.0
    %594 = vmatpush1.msra.mxu0 %v565
    %595 = vmatprep.subr.mxu0 0.0
    %596 = vmatpush1.msra.mxu0 %v566
    %597 = vmatprep.subr.mxu0 0.0
    %598 = vmatpush1.msra.mxu0 %v567
    %599 = vmatprep.subr.mxu0 0.0
    %600 = vmatpush1.msra.mxu0 %v568
    %601 = vmatprep.subr.mxu0 0.0
    %602 = vmatpush1.msra.mxu0 %v569
    %603 = vmatprep.subr.mxu0 0.0
    %604 = vmatpush1.msra.mxu0 %v570
    %605 = vmatprep.subr.mxu0 0.0
    %606 = vmatpush1.msra.mxu0 %v571
    %607 = vmatprep.subr.mxu0 0.0
    %608 = vmatpush1.msra.mxu0 %v572
    %609 = vmatprep.subr.mxu0 0.0
    %610 = vmatpush1.msra.mxu0 %v573
    %611 = vmatprep.subr.mxu0 0.0
    %612 = vmatpush1.msra.mxu0 %v574
    %613 = vmatprep.subr.mxu0 0.0
    %614 = vmatpush1.msra.mxu0 %v575
    %615 = vmatprep.subr.mxu0 0.0
    %616 = vmatpush1.msra.mxu0 0.0
    %617 = vmatprep.subr.mxu0 0.0
    %618 = vmatpush1.msra.mxu0 0.0
    %619 = vmatprep.subr.mxu0 0.0
    %620 = vmatpush1.msra.mxu0 0.0
    %621 = vmatprep.subr.mxu0 0.0
    %622 = vmatpush1.msra.mxu0 0.0
    %623 = vmatprep.subr.mxu0 0.0
    %624 = vmatpush1.msra.mxu0 0.0
    %625 = vmatprep.subr.mxu0 0.0
    %626 = vmatpush1.msra.mxu0 0.0
    %627 = vmatprep.subr.mxu0 0.0
    %628 = vmatpush1.msra.mxu0 0.0
    %629 = vmatprep.subr.mxu0 0.0
    %630 = vmatpush1.msra.mxu0 0.0
    %631 = vmatprep.subr.mxu0 0.0
    %632 = vmatpush1.msra.mxu0 0.0
    %633 = vmatprep.subr.mxu0 0.0
    %634 = vmatpush1.msra.mxu0 0.0
    %635 = vmatprep.subr.mxu0 0.0
    %636 = vmatpush1.msra.mxu0 0.0
    %637 = vmatprep.subr.mxu0 0.0
    %638 = vmatpush1.msra.mxu0 0.0
    %639 = vmatprep.subr.mxu0 0.0
    %640 = vmatpush1.msra.mxu0 0.0
    %641 = vmatprep.subr.mxu0 0.0
    %642 = vmatpush1.msra.mxu0 0.0
    %643 = vmatprep.subr.mxu0 0.0
    %644 = vmatpush1.msra.mxu0 0.0
    %645 = vmatprep.subr.mxu0 0.0
    %646 = vmatpush1.msra.mxu0 0.0
    %647 = vmatprep.mubr.f32.mxu0 0.0
    %648 = vmatmul.mubr.f32.gmra.mrb[0].mxu0 %v558
    %v649 = vpop.f32.mrb[0].mxu0
    %v650 = vadd.f32 %v581, %v649
    %v651 = vpop.f32.mrb[0].mxu0
    %652 = vmatprep.mubr.f32.mxu0 0.0
    %653 = vmatmul.mubr.f32.gmra.mrb[0].mxu0 %v559
    %v654 = vpop.f32.mrb[0].mxu0
    %v655 = vadd.f32 %v581, %v654
    %v656 = vpop.f32.mrb[0].mxu0
    %657 = vdwg.mxu0
    %658 = vst [vmem:[#allocation13] sm:$0xff] %v650
    %659 = vst [vmem:[#allocation13 + $0x8] sm:$0xff] %v655
    // Predicated region
    $region58: #{tpu_custom_call.1} parent=1 // pred_check
      _
    $region59: #{tpu_custom_call.1} parent=1 // pred_check_branch
      %661 = sbr.rel (0) target = $region61
    $region60: #{tpu_custom_call.1} parent=1 // pred_region
      %s663 = ssub.s32 256, 256
      %664 = vsyncadd [#allocation4], %s663
      %s665 = sshll.u32 [#allocation13], 4
      %s666 = int_to_ptr.vmem [resolvable:$true] %s665
      %671 = dma.vmem_to_hbm [thread:$0]  %s666, 256, %s8, [#allocation4], 128, 128, 8
    $region61: #{tpu_custom_call.1} parent=1 // pred_fallthru
      _
    // Predicated region
    $region62: #{tpu_custom_call.1} parent=1 // pred_check
      _
    $region63: #{tpu_custom_call.1} parent=1 // pred_check_branch
      %673 = sbr.rel (0) target = $region65
    $region64: #{tpu_custom_call.1} parent=1 // pred_region
      %674 = dma.done [#allocation4], 256
    $region65: #{tpu_custom_call.1} parent=1 // pred_fallthru
      _
    %675 = vsyncpa [#allocation3], 1
    %676 = vsyncpa [#allocation6], 1
    %677 = vsyncpa [#allocation9], 1
    %678 = vsyncpa [#allocation12], 1
    %679 = vsyncpa [#allocation4], 1

</llo_original>
